<compile_context>
chip_gen: v7x
topology: tpu7x:2x2x1
jax: 0.10.0
libtpu: 0.0.40
codegen_flags: <defaults>
</compile_context>

<pallas_src>
import jax
import jax.numpy as jnp
from jax.experimental import pallas as pl
from jax.experimental.pallas import tpu as pltpu


def _get_t_kernel(data_e_ref, w_ref, ent_ref, r_ref, out_ref, e_buf, sem):
    """Fused entity gather + softmax(N) + weighted sum(N) + rel add.

    data_e_ref: (B_pad*N,) int32 SMEM  flattened neighbor ids (scalar prefetch)
    w_ref:      (TB, N)    f32  VMEM   edge-weight logits for this batch tile
    ent_ref:    (E+1, D)   f32  HBM    entity embedding table (pl.ANY)
    r_ref:      (TB, D)    f32  VMEM   relation embedding rows for this tile
    out_ref:    (TB, D)    f32  VMEM   out_t tile
    e_buf:      (N*TB, D)  f32  VMEM   gather scratch, row layout k*TB + t
    sem:        (1,) DMA semaphore shared by all row copies
    """
    tb, n = w_ref.shape
    d = out_ref.shape[-1]
    base = pl.program_id(0) * (tb * n)

    # 1) Issue all TB*N row-gather DMAs (HBM -> VMEM), all on one semaphore.
    @pl.loop(0, tb)
    def _issue(t):
        for k in range(n):                              # N is small & static
            idx = data_e_ref[base + t * n + k]          # dynamic SMEM read
            pltpu.make_async_copy(
                ent_ref.at[pl.ds(idx, 1)],              # (1, D) HBM row
                e_buf.at[pl.ds(k * tb + t, 1)],         # (1, D) VMEM slot
                sem.at[0],
            ).start()

    # 2) Softmax over the neighbor axis while the gather DMAs are in flight.
    w = w_ref[...]                                      # (TB, N)
    m = jnp.max(w, axis=1, keepdims=True)
    p = jnp.exp(w - m)                                  # unnormalized weights
    denom = jnp.sum(p, axis=1, keepdims=True)           # (TB, 1)

    # 3) Single aggregate wait: DMA semaphores count bytes, so a wait sized
    #    like the full scratch buffer == wait for all TB*N row copies.
    pltpu.make_async_copy(e_buf, e_buf, sem.at[0]).wait()

    # 4) Weighted reduction over neighbors: N unrolled (TB, D) FMAs over
    #    contiguous slabs; no (TB, N, D) materialization, no relayout.
    acc = jnp.zeros((tb, d), jnp.float32)
    for k in range(n):
        e_k = e_buf[pl.ds(k * tb, tb), :]               # (TB, D), static slice
        acc = acc + p[:, k:k + 1] * e_k

    # 5) Normalize AFTER the reduction (one (TB, D) multiply) using the EUP
    #    reciprocal; one Newton step restores full f32 accuracy for ~free.
    inv = pl.reciprocal(denom, approx=True)
    inv = inv * (2.0 - denom * inv)
    out_ref[...] = acc * inv + r_ref[...]


def network_forward(params, data_r, data_e, rel, pos_id, neg_id, *, tb=64):
    """JAX wrapper reproducing Network.forward."""
    entity_emb = params["entity_embedding"]   # (entity_size+1, D) f32
    edge_w = params["edge_weight"]            # (rel_size*(rel_size+1)+1, 1) f32
    rel_emb = params["rel_embedding"]         # (rel_size, D) f32

    B = data_e.shape[0]
    D = entity_emb.shape[1]

    data_r = data_r.astype(jnp.int32).reshape(B, -1)
    data_e = data_e.astype(jnp.int32).reshape(B, -1)
    rel = rel.astype(jnp.int32).reshape(B)
    pos_id = pos_id.astype(jnp.int32).reshape(-1)
    neg_id = neg_id.astype(jnp.int32).reshape(-1)
    N = data_e.shape[1]

    # Tiny gathers kept in JAX glue (B*N scalars and B rows of D).
    w_logits = edge_w[data_r, 0]              # (B, N)
    r_gather = rel_emb[rel]                   # (B, D)

    # Pad the batch to a multiple of the (sublane-aligned) tile size.
    num_tiles = pl.cdiv(B, tb)
    b_pad = num_tiles * tb
    pad = b_pad - B
    if pad:
        w_logits = jnp.pad(w_logits, ((0, pad), (0, 0)))
        r_gather = jnp.pad(r_gather, ((0, pad), (0, 0)))
        data_e = jnp.pad(data_e, ((0, pad), (0, 0)))   # index 0 is a valid row

    # Flat 1-D scalar prefetch: only pads to next power of two (no 128-word
    # per-row SMEM padding like a 2-D array would incur).
    data_e_flat = data_e.reshape(-1)

    grid_spec = pltpu.PrefetchScalarGridSpec(
        num_scalar_prefetch=1,                 # data_e_flat -> SMEM
        grid=(num_tiles,),
        in_specs=[
            pl.BlockSpec((tb, N), lambda i, de: (i, 0)),   # edge-weight logits
            pl.BlockSpec(memory_space=pl.ANY),             # entity table in HBM
            pl.BlockSpec((tb, D), lambda i, de: (i, 0)),   # rel rows
        ],
        out_specs=pl.BlockSpec((tb, D), lambda i, de: (i, 0)),
        scratch_shapes=[
            pltpu.VMEM((tb * N, D), jnp.float32),          # gathered rows
            pltpu.SemaphoreType.DMA((1,)),                 # single shared sem
        ],
    )

    out_t = pl.pallas_call(
        _get_t_kernel,
        out_shape=jax.ShapeDtypeStruct((b_pad, D), jnp.float32),
        grid_spec=grid_spec,
        compiler_params=pltpu.CompilerParams(
            dimension_semantics=("parallel",),   # independent batch tiles
        ),
    )(data_e_flat, w_logits, entity_emb, r_gather)

    out_t = out_t[:B]

    # pos/neg outputs are plain embedding lookups (no compute) -> JAX glue.
    pos_out = entity_emb[pos_id]              # (B, D)
    neg_out = entity_emb[neg_id]              # (B, D)
    return out_t, pos_out, neg_out


def init_params(key, entity_size, dimension, rel_size):
    """Deterministic N(0,1) init, matching nn.Embedding defaults (float32)."""
    k1, k2, k3 = jax.random.split(key, 3)
    return {
        "entity_embedding": jax.random.normal(
            k1, (entity_size + 1, dimension), jnp.float32),
        "edge_weight": jax.random.normal(
            k2, (rel_size * (rel_size + 1) + 1, 1), jnp.float32),
        "rel_embedding": jax.random.normal(
            k3, (rel_size, dimension), jnp.float32),
    }


def _reference_forward(params, data_r, data_e, rel, pos_id, neg_id):
    """Pure-JAX reference of the PyTorch forward, for a sanity check."""
    entity_emb = params["entity_embedding"]
    edge_w = params["edge_weight"]
    rel_emb = params["rel_embedding"]
    B = data_e.shape[0]
    w = edge_w[data_r.reshape(B, -1), 0]
    w = jax.nn.softmax(w, axis=1)[:, :, None]
    e = entity_emb[data_e.reshape(B, -1)]
    eh = jnp.sum(e * w, axis=1)
    out_t = eh + rel_emb[rel.reshape(B)]
    return out_t, entity_emb[pos_id], entity_emb[neg_id]


if __name__ == "__main__":
    # D=128 keeps output stores lane-dense; B=200 with TB=64 gives an even
    # 4-tile "parallel" grid (both v7x cores busy) and exercises batch padding.
    entity_size = 300
    dimension = 128
    rel_size = 6
    B, N = 200, 8

    key = jax.random.PRNGKey(0)
    kp, k1, k2, k3, k4, k5 = jax.random.split(key, 6)

    params = init_params(kp, entity_size, dimension, rel_size)

    data_r = jax.random.randint(
        k1, (B, N), 0, rel_size * (rel_size + 1) + 1, dtype=jnp.int32)
    data_e = jax.random.randint(
        k2, (B, N), 0, entity_size + 1, dtype=jnp.int32)
    rel = jax.random.randint(k3, (B,), 0, rel_size, dtype=jnp.int32)
    pos_id = jax.random.randint(k4, (B,), 0, entity_size + 1, dtype=jnp.int32)
    neg_id = jax.random.randint(k5, (B,), 0, entity_size + 1, dtype=jnp.int32)

    out_t, pos_out, neg_out = network_forward(
        params, data_r, data_e, rel, pos_id, neg_id)
    jax.block_until_ready((out_t, pos_out, neg_out))

    # Sanity check against pure-JAX reference.
    ref_t, ref_p, ref_n = _reference_forward(
        params, data_r, data_e, rel, pos_id, neg_id)
    assert out_t.shape == (B, dimension)
    assert pos_out.shape == (B, dimension)
    assert neg_out.shape == (B, dimension)
    assert jnp.allclose(out_t, ref_t, atol=1e-3, rtol=1e-3)
    assert jnp.allclose(pos_out, ref_p)
    assert jnp.allclose(neg_out, ref_n)

    print("KERNEL_OK")
</pallas_src>

<mosaic_0001>
module attributes {stable_mosaic.version = 11 : i64} {
  func.func @_get_t_kernel(%arg0: i32, %arg1: memref<2048xi32, #tpu.memory_space<smem>>, %arg2: memref<64x8xf32, #tpu.memory_space<vmem>>, %arg3: memref<301x128xf32, #tpu.memory_space<any>>, %arg4: memref<64x128xf32, #tpu.memory_space<vmem>>, %arg5: memref<64x128xf32, #tpu.memory_space<vmem>>, %arg6: memref<512x128xf32, #tpu.memory_space<vmem>>, %arg7: memref<1x!tpu.dma_semaphore, #tpu.memory_space<semaphore_mem>>) attributes {dimension_semantics = [#tpu.dimension_semantics<parallel>], iteration_bounds = array<i64: 4>, scalar_prefetch = 1 : i64, scratch_operands = 2 : i64, tpu.core_type = #tpu.core_type<tc>, window_params = [{transform_indices = @transform_0, window_bounds = array<i64: 64, 8>}, {}, {transform_indices = @transform_2, window_bounds = array<i64: 64, 128>}, {transform_indices = @transform_3, window_bounds = array<i64: 64, 128>}]} {
    %c512_i32 = arith.constant 512 : i32
    %0 = arith.muli %arg0, %c512_i32 : i32
    %c0_i32 = arith.constant 0 : i32
    %c64_i32 = arith.constant 64 : i32
    %1 = arith.addi %c0_i32, %c64_i32 : i32
    %c1_i32 = arith.constant 1 : i32
    scf.for %arg8 = %c0_i32 to %1 step %c1_i32  : i32 {
      %c1_i32_19 = arith.constant 1 : i32
      %63 = arith.muli %arg8, %c1_i32_19 : i32
      %c0_i32_20 = arith.constant 0 : i32
      %64 = arith.addi %c0_i32_20, %63 : i32
      %c8_i32 = arith.constant 8 : i32
      %65 = arith.muli %64, %c8_i32 : i32
      %66 = arith.addi %0, %65 : i32
      %c0_i32_21 = arith.constant 0 : i32
      %67 = arith.addi %66, %c0_i32_21 : i32
      %68 = arith.index_cast %67 : i32 to index
      %69 = memref.load %arg1[%68] : memref<2048xi32, #tpu.memory_space<smem>>
      %c0_i32_22 = arith.constant 0 : i32
      %70 = arith.addi %c0_i32_22, %64 : i32
      %c0_i32_23 = arith.constant 0 : i32
      %c0_i32_24 = arith.constant 0 : i32
      %71 = tpu.memref_slice %arg3[%69, %c0_i32_24] : memref<301x128xf32, #tpu.memory_space<any>> -> memref<1x128xf32, #tpu.memory_space<any>>
      %c0_i32_25 = arith.constant 0 : i32
      %72 = tpu.memref_slice %arg6[%70, %c0_i32_25] : memref<512x128xf32, #tpu.memory_space<vmem>> -> memref<1x128xf32, #tpu.memory_space<vmem>>
      %73 = tpu.memref_slice %arg7[%c0_i32_23] : memref<1x!tpu.dma_semaphore, #tpu.memory_space<semaphore_mem>> -> memref<1x!tpu.dma_semaphore, #tpu.memory_space<semaphore_mem>>
      %74 = tpu.memref_squeeze %73 : memref<1x!tpu.dma_semaphore, #tpu.memory_space<semaphore_mem>> -> memref<!tpu.dma_semaphore, #tpu.memory_space<semaphore_mem>>
      tpu.enqueue_dma source(%71 : memref<1x128xf32, #tpu.memory_space<any>>) target(%72 : memref<1x128xf32, #tpu.memory_space<vmem>>) target_semaphore(%74 : memref<!tpu.dma_semaphore, #tpu.memory_space<semaphore_mem>>)
      %c8_i32_26 = arith.constant 8 : i32
      %75 = arith.muli %64, %c8_i32_26 : i32
      %76 = arith.addi %0, %75 : i32
      %c1_i32_27 = arith.constant 1 : i32
      %77 = arith.addi %76, %c1_i32_27 : i32
      %78 = arith.index_cast %77 : i32 to index
      %79 = memref.load %arg1[%78] : memref<2048xi32, #tpu.memory_space<smem>>
      %c64_i32_28 = arith.constant 64 : i32
      %80 = arith.addi %c64_i32_28, %64 : i32
      %c0_i32_29 = arith.constant 0 : i32
      %c0_i32_30 = arith.constant 0 : i32
      %81 = tpu.memref_slice %arg3[%79, %c0_i32_30] : memref<301x128xf32, #tpu.memory_space<any>> -> memref<1x128xf32, #tpu.memory_space<any>>
      %c0_i32_31 = arith.constant 0 : i32
      %82 = tpu.memref_slice %arg6[%80, %c0_i32_31] : memref<512x128xf32, #tpu.memory_space<vmem>> -> memref<1x128xf32, #tpu.memory_space<vmem>>
      %83 = tpu.memref_slice %arg7[%c0_i32_29] : memref<1x!tpu.dma_semaphore, #tpu.memory_space<semaphore_mem>> -> memref<1x!tpu.dma_semaphore, #tpu.memory_space<semaphore_mem>>
      %84 = tpu.memref_squeeze %83 : memref<1x!tpu.dma_semaphore, #tpu.memory_space<semaphore_mem>> -> memref<!tpu.dma_semaphore, #tpu.memory_space<semaphore_mem>>
      tpu.enqueue_dma source(%81 : memref<1x128xf32, #tpu.memory_space<any>>) target(%82 : memref<1x128xf32, #tpu.memory_space<vmem>>) target_semaphore(%84 : memref<!tpu.dma_semaphore, #tpu.memory_space<semaphore_mem>>)
      %c8_i32_32 = arith.constant 8 : i32
      %85 = arith.muli %64, %c8_i32_32 : i32
      %86 = arith.addi %0, %85 : i32
      %c2_i32 = arith.constant 2 : i32
      %87 = arith.addi %86, %c2_i32 : i32
      %88 = arith.index_cast %87 : i32 to index
      %89 = memref.load %arg1[%88] : memref<2048xi32, #tpu.memory_space<smem>>
      %c128_i32 = arith.constant 128 : i32
      %90 = arith.addi %c128_i32, %64 : i32
      %c0_i32_33 = arith.constant 0 : i32
      %c0_i32_34 = arith.constant 0 : i32
      %91 = tpu.memref_slice %arg3[%89, %c0_i32_34] : memref<301x128xf32, #tpu.memory_space<any>> -> memref<1x128xf32, #tpu.memory_space<any>>
      %c0_i32_35 = arith.constant 0 : i32
      %92 = tpu.memref_slice %arg6[%90, %c0_i32_35] : memref<512x128xf32, #tpu.memory_space<vmem>> -> memref<1x128xf32, #tpu.memory_space<vmem>>
      %93 = tpu.memref_slice %arg7[%c0_i32_33] : memref<1x!tpu.dma_semaphore, #tpu.memory_space<semaphore_mem>> -> memref<1x!tpu.dma_semaphore, #tpu.memory_space<semaphore_mem>>
      %94 = tpu.memref_squeeze %93 : memref<1x!tpu.dma_semaphore, #tpu.memory_space<semaphore_mem>> -> memref<!tpu.dma_semaphore, #tpu.memory_space<semaphore_mem>>
      tpu.enqueue_dma source(%91 : memref<1x128xf32, #tpu.memory_space<any>>) target(%92 : memref<1x128xf32, #tpu.memory_space<vmem>>) target_semaphore(%94 : memref<!tpu.dma_semaphore, #tpu.memory_space<semaphore_mem>>)
      %c8_i32_36 = arith.constant 8 : i32
      %95 = arith.muli %64, %c8_i32_36 : i32
      %96 = arith.addi %0, %95 : i32
      %c3_i32 = arith.constant 3 : i32
      %97 = arith.addi %96, %c3_i32 : i32
      %98 = arith.index_cast %97 : i32 to index
      %99 = memref.load %arg1[%98] : memref<2048xi32, #tpu.memory_space<smem>>
      %c192_i32 = arith.constant 192 : i32
      %100 = arith.addi %c192_i32, %64 : i32
      %c0_i32_37 = arith.constant 0 : i32
      %c0_i32_38 = arith.constant 0 : i32
      %101 = tpu.memref_slice %arg3[%99, %c0_i32_38] : memref<301x128xf32, #tpu.memory_space<any>> -> memref<1x128xf32, #tpu.memory_space<any>>
      %c0_i32_39 = arith.constant 0 : i32
      %102 = tpu.memref_slice %arg6[%100, %c0_i32_39] : memref<512x128xf32, #tpu.memory_space<vmem>> -> memref<1x128xf32, #tpu.memory_space<vmem>>
      %103 = tpu.memref_slice %arg7[%c0_i32_37] : memref<1x!tpu.dma_semaphore, #tpu.memory_space<semaphore_mem>> -> memref<1x!tpu.dma_semaphore, #tpu.memory_space<semaphore_mem>>
      %104 = tpu.memref_squeeze %103 : memref<1x!tpu.dma_semaphore, #tpu.memory_space<semaphore_mem>> -> memref<!tpu.dma_semaphore, #tpu.memory_space<semaphore_mem>>
      tpu.enqueue_dma source(%101 : memref<1x128xf32, #tpu.memory_space<any>>) target(%102 : memref<1x128xf32, #tpu.memory_space<vmem>>) target_semaphore(%104 : memref<!tpu.dma_semaphore, #tpu.memory_space<semaphore_mem>>)
      %c8_i32_40 = arith.constant 8 : i32
      %105 = arith.muli %64, %c8_i32_40 : i32
      %106 = arith.addi %0, %105 : i32
      %c4_i32 = arith.constant 4 : i32
      %107 = arith.addi %106, %c4_i32 : i32
      %108 = arith.index_cast %107 : i32 to index
      %109 = memref.load %arg1[%108] : memref<2048xi32, #tpu.memory_space<smem>>
      %c256_i32 = arith.constant 256 : i32
      %110 = arith.addi %c256_i32, %64 : i32
      %c0_i32_41 = arith.constant 0 : i32
      %c0_i32_42 = arith.constant 0 : i32
      %111 = tpu.memref_slice %arg3[%109, %c0_i32_42] : memref<301x128xf32, #tpu.memory_space<any>> -> memref<1x128xf32, #tpu.memory_space<any>>
      %c0_i32_43 = arith.constant 0 : i32
      %112 = tpu.memref_slice %arg6[%110, %c0_i32_43] : memref<512x128xf32, #tpu.memory_space<vmem>> -> memref<1x128xf32, #tpu.memory_space<vmem>>
      %113 = tpu.memref_slice %arg7[%c0_i32_41] : memref<1x!tpu.dma_semaphore, #tpu.memory_space<semaphore_mem>> -> memref<1x!tpu.dma_semaphore, #tpu.memory_space<semaphore_mem>>
      %114 = tpu.memref_squeeze %113 : memref<1x!tpu.dma_semaphore, #tpu.memory_space<semaphore_mem>> -> memref<!tpu.dma_semaphore, #tpu.memory_space<semaphore_mem>>
      tpu.enqueue_dma source(%111 : memref<1x128xf32, #tpu.memory_space<any>>) target(%112 : memref<1x128xf32, #tpu.memory_space<vmem>>) target_semaphore(%114 : memref<!tpu.dma_semaphore, #tpu.memory_space<semaphore_mem>>)
      %c8_i32_44 = arith.constant 8 : i32
      %115 = arith.muli %64, %c8_i32_44 : i32
      %116 = arith.addi %0, %115 : i32
      %c5_i32 = arith.constant 5 : i32
      %117 = arith.addi %116, %c5_i32 : i32
      %118 = arith.index_cast %117 : i32 to index
      %119 = memref.load %arg1[%118] : memref<2048xi32, #tpu.memory_space<smem>>
      %c320_i32 = arith.constant 320 : i32
      %120 = arith.addi %c320_i32, %64 : i32
      %c0_i32_45 = arith.constant 0 : i32
      %c0_i32_46 = arith.constant 0 : i32
      %121 = tpu.memref_slice %arg3[%119, %c0_i32_46] : memref<301x128xf32, #tpu.memory_space<any>> -> memref<1x128xf32, #tpu.memory_space<any>>
      %c0_i32_47 = arith.constant 0 : i32
      %122 = tpu.memref_slice %arg6[%120, %c0_i32_47] : memref<512x128xf32, #tpu.memory_space<vmem>> -> memref<1x128xf32, #tpu.memory_space<vmem>>
      %123 = tpu.memref_slice %arg7[%c0_i32_45] : memref<1x!tpu.dma_semaphore, #tpu.memory_space<semaphore_mem>> -> memref<1x!tpu.dma_semaphore, #tpu.memory_space<semaphore_mem>>
      %124 = tpu.memref_squeeze %123 : memref<1x!tpu.dma_semaphore, #tpu.memory_space<semaphore_mem>> -> memref<!tpu.dma_semaphore, #tpu.memory_space<semaphore_mem>>
      tpu.enqueue_dma source(%121 : memref<1x128xf32, #tpu.memory_space<any>>) target(%122 : memref<1x128xf32, #tpu.memory_space<vmem>>) target_semaphore(%124 : memref<!tpu.dma_semaphore, #tpu.memory_space<semaphore_mem>>)
      %c8_i32_48 = arith.constant 8 : i32
      %125 = arith.muli %64, %c8_i32_48 : i32
      %126 = arith.addi %0, %125 : i32
      %c6_i32 = arith.constant 6 : i32
      %127 = arith.addi %126, %c6_i32 : i32
      %128 = arith.index_cast %127 : i32 to index
      %129 = memref.load %arg1[%128] : memref<2048xi32, #tpu.memory_space<smem>>
      %c384_i32 = arith.constant 384 : i32
      %130 = arith.addi %c384_i32, %64 : i32
      %c0_i32_49 = arith.constant 0 : i32
      %c0_i32_50 = arith.constant 0 : i32
      %131 = tpu.memref_slice %arg3[%129, %c0_i32_50] : memref<301x128xf32, #tpu.memory_space<any>> -> memref<1x128xf32, #tpu.memory_space<any>>
      %c0_i32_51 = arith.constant 0 : i32
      %132 = tpu.memref_slice %arg6[%130, %c0_i32_51] : memref<512x128xf32, #tpu.memory_space<vmem>> -> memref<1x128xf32, #tpu.memory_space<vmem>>
      %133 = tpu.memref_slice %arg7[%c0_i32_49] : memref<1x!tpu.dma_semaphore, #tpu.memory_space<semaphore_mem>> -> memref<1x!tpu.dma_semaphore, #tpu.memory_space<semaphore_mem>>
      %134 = tpu.memref_squeeze %133 : memref<1x!tpu.dma_semaphore, #tpu.memory_space<semaphore_mem>> -> memref<!tpu.dma_semaphore, #tpu.memory_space<semaphore_mem>>
      tpu.enqueue_dma source(%131 : memref<1x128xf32, #tpu.memory_space<any>>) target(%132 : memref<1x128xf32, #tpu.memory_space<vmem>>) target_semaphore(%134 : memref<!tpu.dma_semaphore, #tpu.memory_space<semaphore_mem>>)
      %c8_i32_52 = arith.constant 8 : i32
      %135 = arith.muli %64, %c8_i32_52 : i32
      %136 = arith.addi %0, %135 : i32
      %c7_i32 = arith.constant 7 : i32
      %137 = arith.addi %136, %c7_i32 : i32
      %138 = arith.index_cast %137 : i32 to index
      %139 = memref.load %arg1[%138] : memref<2048xi32, #tpu.memory_space<smem>>
      %c448_i32 = arith.constant 448 : i32
      %140 = arith.addi %c448_i32, %64 : i32
      %c0_i32_53 = arith.constant 0 : i32
      %c0_i32_54 = arith.constant 0 : i32
      %141 = tpu.memref_slice %arg3[%139, %c0_i32_54] : memref<301x128xf32, #tpu.memory_space<any>> -> memref<1x128xf32, #tpu.memory_space<any>>
      %c0_i32_55 = arith.constant 0 : i32
      %142 = tpu.memref_slice %arg6[%140, %c0_i32_55] : memref<512x128xf32, #tpu.memory_space<vmem>> -> memref<1x128xf32, #tpu.memory_space<vmem>>
      %143 = tpu.memref_slice %arg7[%c0_i32_53] : memref<1x!tpu.dma_semaphore, #tpu.memory_space<semaphore_mem>> -> memref<1x!tpu.dma_semaphore, #tpu.memory_space<semaphore_mem>>
      %144 = tpu.memref_squeeze %143 : memref<1x!tpu.dma_semaphore, #tpu.memory_space<semaphore_mem>> -> memref<!tpu.dma_semaphore, #tpu.memory_space<semaphore_mem>>
      tpu.enqueue_dma source(%141 : memref<1x128xf32, #tpu.memory_space<any>>) target(%142 : memref<1x128xf32, #tpu.memory_space<vmem>>) target_semaphore(%144 : memref<!tpu.dma_semaphore, #tpu.memory_space<semaphore_mem>>)
    }
    %c64_i32_0 = arith.constant 64 : i32
    %c0 = arith.constant 0 : index
    %c0_1 = arith.constant 0 : index
    %2 = vector.load %arg2[%c0, %c0_1] : memref<64x8xf32, #tpu.memory_space<vmem>>, vector<64x8xf32>
    %cst = arith.constant dense<0xFF800000> : vector<64xf32>
    %3 = vector.multi_reduction <maximumf>, %2, %cst [1] : vector<64x8xf32> to vector<64xf32>
    %4 = vector.shape_cast %3 : vector<64xf32> to vector<64x1xf32>
    %5 = vector.broadcast %4 : vector<64x1xf32> to vector<64x8xf32>
    %6 = arith.subf %2, %5 : vector<64x8xf32>
    %7 = math.exp %6 : vector<64x8xf32>
    %cst_2 = arith.constant dense<0.000000e+00> : vector<64xf32>
    %8 = vector.multi_reduction <add>, %7, %cst_2 [1] : vector<64x8xf32> to vector<64xf32>
    %9 = vector.shape_cast %8 : vector<64xf32> to vector<64x1xf32>
    %c0_i32_3 = arith.constant 0 : i32
    %10 = tpu.memref_slice %arg7[%c0_i32_3] : memref<1x!tpu.dma_semaphore, #tpu.memory_space<semaphore_mem>> -> memref<1x!tpu.dma_semaphore, #tpu.memory_space<semaphore_mem>>
    %11 = tpu.memref_squeeze %10 : memref<1x!tpu.dma_semaphore, #tpu.memory_space<semaphore_mem>> -> memref<!tpu.dma_semaphore, #tpu.memory_space<semaphore_mem>>
    tpu.wait_dma2 semaphore(%11 : memref<!tpu.dma_semaphore, #tpu.memory_space<semaphore_mem>>) src(%arg6 : memref<512x128xf32, #tpu.memory_space<vmem>>) dst(%arg6 : memref<512x128xf32, #tpu.memory_space<vmem>>)
    %cst_4 = arith.constant 0.000000e+00 : f32
    %12 = vector.broadcast %cst_4 : f32 to vector<64x128xf32>
    %c0_5 = arith.constant 0 : index
    %c0_6 = arith.constant 0 : index
    %13 = vector.load %arg6[%c0_5, %c0_6] : memref<512x128xf32, #tpu.memory_space<vmem>>, vector<64x128xf32>
    %14 = vector.extract_strided_slice %7 {offsets = [0, 0], sizes = [64, 1], strides = [1, 1]} : vector<64x8xf32> to vector<64x1xf32>
    %15 = vector.broadcast %14 : vector<64x1xf32> to vector<64x128xf32>
    %16 = arith.mulf %15, %13 : vector<64x128xf32>
    %17 = arith.addf %12, %16 : vector<64x128xf32>
    %c64 = arith.constant 64 : index
    %c0_7 = arith.constant 0 : index
    %18 = vector.load %arg6[%c64, %c0_7] : memref<512x128xf32, #tpu.memory_space<vmem>>, vector<64x128xf32>
    %19 = vector.extract_strided_slice %7 {offsets = [0, 1], sizes = [64, 1], strides = [1, 1]} : vector<64x8xf32> to vector<64x1xf32>
    %20 = vector.broadcast %19 : vector<64x1xf32> to vector<64x128xf32>
    %21 = arith.mulf %20, %18 : vector<64x128xf32>
    %22 = arith.addf %17, %21 : vector<64x128xf32>
    %c128 = arith.constant 128 : index
    %c0_8 = arith.constant 0 : index
    %23 = vector.load %arg6[%c128, %c0_8] : memref<512x128xf32, #tpu.memory_space<vmem>>, vector<64x128xf32>
    %24 = vector.extract_strided_slice %7 {offsets = [0, 2], sizes = [64, 1], strides = [1, 1]} : vector<64x8xf32> to vector<64x1xf32>
    %25 = vector.broadcast %24 : vector<64x1xf32> to vector<64x128xf32>
    %26 = arith.mulf %25, %23 : vector<64x128xf32>
    %27 = arith.addf %22, %26 : vector<64x128xf32>
    %c192 = arith.constant 192 : index
    %c0_9 = arith.constant 0 : index
    %28 = vector.load %arg6[%c192, %c0_9] : memref<512x128xf32, #tpu.memory_space<vmem>>, vector<64x128xf32>
    %29 = vector.extract_strided_slice %7 {offsets = [0, 3], sizes = [64, 1], strides = [1, 1]} : vector<64x8xf32> to vector<64x1xf32>
    %30 = vector.broadcast %29 : vector<64x1xf32> to vector<64x128xf32>
    %31 = arith.mulf %30, %28 : vector<64x128xf32>
    %32 = arith.addf %27, %31 : vector<64x128xf32>
    %c256 = arith.constant 256 : index
    %c0_10 = arith.constant 0 : index
    %33 = vector.load %arg6[%c256, %c0_10] : memref<512x128xf32, #tpu.memory_space<vmem>>, vector<64x128xf32>
    %34 = vector.extract_strided_slice %7 {offsets = [0, 4], sizes = [64, 1], strides = [1, 1]} : vector<64x8xf32> to vector<64x1xf32>
    %35 = vector.broadcast %34 : vector<64x1xf32> to vector<64x128xf32>
    %36 = arith.mulf %35, %33 : vector<64x128xf32>
    %37 = arith.addf %32, %36 : vector<64x128xf32>
    %c320 = arith.constant 320 : index
    %c0_11 = arith.constant 0 : index
    %38 = vector.load %arg6[%c320, %c0_11] : memref<512x128xf32, #tpu.memory_space<vmem>>, vector<64x128xf32>
    %39 = vector.extract_strided_slice %7 {offsets = [0, 5], sizes = [64, 1], strides = [1, 1]} : vector<64x8xf32> to vector<64x1xf32>
    %40 = vector.broadcast %39 : vector<64x1xf32> to vector<64x128xf32>
    %41 = arith.mulf %40, %38 : vector<64x128xf32>
    %42 = arith.addf %37, %41 : vector<64x128xf32>
    %c384 = arith.constant 384 : index
    %c0_12 = arith.constant 0 : index
    %43 = vector.load %arg6[%c384, %c0_12] : memref<512x128xf32, #tpu.memory_space<vmem>>, vector<64x128xf32>
    %44 = vector.extract_strided_slice %7 {offsets = [0, 6], sizes = [64, 1], strides = [1, 1]} : vector<64x8xf32> to vector<64x1xf32>
    %45 = vector.broadcast %44 : vector<64x1xf32> to vector<64x128xf32>
    %46 = arith.mulf %45, %43 : vector<64x128xf32>
    %47 = arith.addf %42, %46 : vector<64x128xf32>
    %c448 = arith.constant 448 : index
    %c0_13 = arith.constant 0 : index
    %48 = vector.load %arg6[%c448, %c0_13] : memref<512x128xf32, #tpu.memory_space<vmem>>, vector<64x128xf32>
    %49 = vector.extract_strided_slice %7 {offsets = [0, 7], sizes = [64, 1], strides = [1, 1]} : vector<64x8xf32> to vector<64x1xf32>
    %50 = vector.broadcast %49 : vector<64x1xf32> to vector<64x128xf32>
    %51 = arith.mulf %50, %48 : vector<64x128xf32>
    %52 = arith.addf %47, %51 : vector<64x128xf32>
    %53 = tpu.reciprocal %9 {approx = true} : vector<64x1xf32> -> vector<64x1xf32>
    %54 = arith.mulf %9, %53 : vector<64x1xf32>
    %cst_14 = arith.constant 2.000000e+00 : f32
    %55 = vector.broadcast %cst_14 : f32 to vector<64x1xf32>
    %56 = arith.subf %55, %54 : vector<64x1xf32>
    %57 = arith.mulf %53, %56 : vector<64x1xf32>
    %58 = vector.broadcast %57 : vector<64x1xf32> to vector<64x128xf32>
    %59 = arith.mulf %52, %58 : vector<64x128xf32>
    %c0_15 = arith.constant 0 : index
    %c0_16 = arith.constant 0 : index
    %60 = vector.load %arg4[%c0_15, %c0_16] : memref<64x128xf32, #tpu.memory_space<vmem>>, vector<64x128xf32>
    %61 = arith.addf %59, %60 : vector<64x128xf32>
    %c0_17 = arith.constant 0 : index
    %c0_18 = arith.constant 0 : index
    %62 = vector.load %arg5[%c0_17, %c0_18] : memref<64x128xf32, #tpu.memory_space<vmem>>, vector<64x128xf32>
    tpu.vector_store %arg5[%c0_17, %c0_18], %61 {strides = array<i32>} : memref<64x128xf32, #tpu.memory_space<vmem>>, vector<64x128xf32>,
    return
  }
  func.func @transform_0(%arg0: i32, %arg1: memref<2048xi32, #tpu.memory_space<smem>>) -> (i32, i32) {
    %c0_i32 = arith.constant 0 : i32
    %c0_i32_0 = arith.constant 0 : i32
    return %arg0, %c0_i32 : i32, i32
  }
  func.func @transform_2(%arg0: i32, %arg1: memref<2048xi32, #tpu.memory_space<smem>>) -> (i32, i32) {
    %c0_i32 = arith.constant 0 : i32
    %c0_i32_0 = arith.constant 0 : i32
    return %arg0, %c0_i32 : i32, i32
  }
  func.func @transform_3(%arg0: i32, %arg1: memref<2048xi32, #tpu.memory_space<smem>>) -> (i32, i32) {
    %c0_i32 = arith.constant 0 : i32
    %c0_i32_0 = arith.constant 0 : i32
    return %arg0, %c0_i32 : i32, i32
  }
}

</mosaic_0001>

<llo_original>
// kernel: tpu_custom_call.1
$region0: #{tpu_custom_call.1}
  #allocation0 [shape = 'u32[]', space=smem, size = 0x4, offset = 0x4, fixed_abs, tag = 'smem constant byte address 0x4 - core index']
  #allocation1 [shape = 'u32[144,128]{1,0:T(1,128)}', space=vmem, size = 0x12000, scoped, tag = 'internal scratch']
  #allocation2 [shape = 'f32[512,128]{1,0:T(8,128)}', space=vmem, size = 0x40000, scoped, tag = 'scratch operand']
  #allocation3 [shape = 's32[1]{0}', space=sflag, size = 0x4, scoped, tag = 'scratch operand']
  #allocation4 [shape = 's32[1]{0}', space=sflag, size = 0x4, scoped, tag = 'scoped memory for tpu_custom_call.1']
  #allocation5 [shape = 'u8[8192]{0}', space=smem, size = 0x2000, scoped, tag = 'prefetched SMEM operand 0']
  #allocation8 [shape = 's32[]', space=sflag, size = 0x4, offset = 0, fixed_abs, tag = 'sflag constant byte address 0x0 - dummy sync flag']
  #allocation9 [shape = 's32[]', space=sflag, size = 0x4, offset = 0, fixed_abs, tag = 'sflag constant byte address 0x0 - dummy sync flag']
  #allocation10 [shape = 'u32[]', space=smem, size = 0x4, offset = 0x44, fixed_abs, tag = 'smem constant byte address 0x44 - assertion arg 0']
  #allocation11 [shape = 'u32[]', space=smem, size = 0x4, offset = 0x48, fixed_abs, tag = 'smem constant byte address 0x48 - assertion arg 1']
  #allocation12 [shape = 's32[]', space=sflag, size = 0x4, offset = 0, fixed_abs, tag = 'sflag constant byte address 0x0 - dummy sync flag']
  #allocation13 [shape = 's32[]', space=sflag, size = 0x4, offset = 0, fixed_abs, tag = 'sflag constant byte address 0x0 - dummy sync flag']
  #allocation14 [shape = 's32[]', space=sflag, size = 0x4, offset = 0, fixed_abs, tag = 'sflag constant byte address 0x0 - dummy sync flag']
  #allocation15 [shape = 's32[]', space=sflag, size = 0x4, offset = 0, fixed_abs, tag = 'sflag constant byte address 0x0 - dummy sync flag']
  #allocation16 [shape = 's32[]', space=sflag, size = 0x4, offset = 0, fixed_abs, tag = 'sflag constant byte address 0x0 - dummy sync flag']
  #allocation17 [shape = 's32[]', space=sflag, size = 0x4, offset = 0, fixed_abs, tag = 'sflag constant byte address 0x0 - dummy sync flag']
  #allocation18 [shape = 's32[]', space=sflag, size = 0x4, offset = 0, fixed_abs, tag = 'sflag constant byte address 0x0 - dummy sync flag']
  #allocation19 [shape = 's32[]', space=sflag, size = 0x4, offset = 0, fixed_abs, tag = 'sflag constant byte address 0x0 - dummy sync flag']
  #allocation20 [shape = 's32[]', space=sflag, size = 0x4, offset = 0, fixed_abs, tag = 'sflag constant byte address 0x0 - dummy sync flag']
  #allocation21 [shape = 's32[]', space=sflag, size = 0x4, offset = 0, fixed_abs, tag = 'sflag constant byte address 0x0 - dummy sync flag']
  #allocation22 [shape = 's32[]', space=sflag, size = 0x4, offset = 0, fixed_abs, tag = 'sflag constant byte address 0x0 - dummy sync flag']
  #allocation23 [shape = 's32[]', space=sflag, size = 0x4, offset = 0, fixed_abs, tag = 'sflag constant byte address 0x0 - dummy sync flag']
  #allocation24 [shape = 's32[]', space=sflag, size = 0x4, offset = 0, fixed_abs, tag = 'sflag constant byte address 0x0 - dummy sync flag']
  #allocation25 [shape = 's32[]', space=sflag, size = 0x4, offset = 0, fixed_abs, tag = 'sflag constant byte address 0x0 - dummy sync flag']
  %s0 = inlined_call_operand.vmem [shape: s32[2048], index: 0, kind: input, shape index: {}]
  %s1 = inlined_call_operand.vmem [shape: f32[256,8], index: 1, kind: input, shape index: {}]
  %s2 = inlined_call_operand.hbm [shape: f32[301,128], index: 2, kind: input, shape index: {}]
  %s3 = inlined_call_operand.vmem [shape: f32[256,128], index: 3, kind: input, shape index: {}]
  %s4 = inlined_call_operand.hbm [shape: f32[256,128], index: 4, kind: output, shape index: {}]
  %s5 = sld [smem:[#allocation0]]
  $region80: #{tpu_custom_call.1} parent=0
    _
  %s7 = ssub.s32 1, %s5
  %s8 = scalar_select 0, %s7, %s5
  %s9 = sshll.u32 %s0, 4
  %s10 = int_to_ptr.vmem [resolvable:$true] %s9
  %12 = dma.vmem_to_smem %s10, 256, [#allocation5], [#allocation4]
  %13 = dma.done [#allocation4], 256
  %14 = sfence
  $region1: #{tpu_custom_call.1} parent=0
    #allocation6 [shape = 'u8[65536]{0}', space=vmem, size = 0x10000, scoped, tag = 'output window, operand 0']
    #allocation7 [shape = 's32[2]{0}', space=sflag, size = 0x8, scoped, tag = 'scoped memory for tpu_custom_call.1']
    %15 = vsyncpa [#allocation7], 0
    %s16 = scalar_lea.sflag [#allocation7], 1
    %17 = vsyncpa %s16, 0
    loop: start=0, step=1, limit=6
    $region2: #{tpu_custom_call.1} parent=1 // loop_pre_header
      _
    $region3: #{tpu_custom_call.1} parent=1 // loop_header
      %s19 = sphi 0, %s23
      %p20 = scmp.ge.s32.totalorder %s19, 6
      %s29 = sphi 0, %s31
      %s32 = sphi 0, %s29
      %s33 = sphi 0, %s32
      %s49 = sphi 0, %s33
      %s55 = sphi 0, %s57
      %s58 = sphi 0, %s55
      %s59 = sphi 0, %s58
      %s75 = sphi 0, %s59
      %s81 = sphi 0, %s83
      %s84 = sphi 0, %s81
      %s85 = sphi 0, %s84
      %s101 = sphi 0, %s85
    $region4: #{tpu_custom_call.1} parent=1 // loop_header_branch
      %22 = sbr.rel (%p20) target = $region8
    $region5: #{tpu_custom_call.1} parent=1 // loop_body
      %s24 = ssub.s32 %s19, 1
      %s25 = ssub.s32 %s19, 2
      %s26 = sadd.s32 %s19, 1
      %s27 = ssub.s32 %s19, %s26
      %p28 = scmp.eq.s32.totalorder %s27, 0
      %s30 = sadd.s32 %s29, 1
      %s31 = scalar_select %p28, %s29, %s30
      %p34 = pneg %p28
      %p35 = scmp.eq.s32.totalorder %s19, 3
      %p36 = por %p34, %p35
      %p37 = scmp.ne.s32.totalorder %s29, %s32
      %p38 = scmp.eq.s32.totalorder %s19, 0
      %p39 = por %p37, %p38
      %p40 = scmp.ne.s32.totalorder %s29, %s32
      %p41 = scmp.eq.s32.totalorder %s24, 3
      %p42 = por %p40, %p41
      %p43 = scmp.ne.s32.totalorder %s32, %s33
      %p44 = scmp.eq.s32.totalorder %s24, 0
      %p45 = por %p43, %p44
      %p46 = scmp.ne.s32.totalorder %s32, %s33
      %p47 = scmp.eq.s32.totalorder %s25, 3
      %p48 = por %p46, %p47
      %p50 = scmp.ne.s32.totalorder %s33, %s49
      %p51 = scmp.eq.s32.totalorder %s25, 0
      %p52 = por %p50, %p51
      %s53 = ssub.s32 %s19, %s26
      %p54 = scmp.eq.s32.totalorder %s53, 0
      %s56 = sadd.s32 %s55, 1
      %s57 = scalar_select %p54, %s55, %s56
      %p60 = pneg %p54
      %p61 = scmp.eq.s32.totalorder %s19, 3
      %p62 = por %p60, %p61
      %p63 = scmp.ne.s32.totalorder %s55, %s58
      %p64 = scmp.eq.s32.totalorder %s19, 0
      %p65 = por %p63, %p64
      %p66 = scmp.ne.s32.totalorder %s55, %s58
      %p67 = scmp.eq.s32.totalorder %s24, 3
      %p68 = por %p66, %p67
      %p69 = scmp.ne.s32.totalorder %s58, %s59
      %p70 = scmp.eq.s32.totalorder %s24, 0
      %p71 = por %p69, %p70
      %p72 = scmp.ne.s32.totalorder %s58, %s59
      %p73 = scmp.eq.s32.totalorder %s25, 3
      %p74 = por %p72, %p73
      %p76 = scmp.ne.s32.totalorder %s59, %s75
      %p77 = scmp.eq.s32.totalorder %s25, 0
      %p78 = por %p76, %p77
      %s79 = ssub.s32 %s19, %s26
      %p80 = scmp.eq.s32.totalorder %s79, 0
      %s82 = sadd.s32 %s81, 1
      %s83 = scalar_select %p80, %s81, %s82
      %p86 = pneg %p80
      %p87 = scmp.eq.s32.totalorder %s19, 3
      %p88 = por %p86, %p87
      %p89 = scmp.ne.s32.totalorder %s81, %s84
      %p90 = scmp.eq.s32.totalorder %s19, 0
      %p91 = por %p89, %p90
      %p92 = scmp.ne.s32.totalorder %s81, %s84
      %p93 = scmp.eq.s32.totalorder %s24, 3
      %p94 = por %p92, %p93
      %p95 = scmp.ne.s32.totalorder %s84, %s85
      %p96 = scmp.eq.s32.totalorder %s24, 0
      %p97 = por %p95, %p96
      %p98 = scmp.ne.s32.totalorder %s84, %s85
      %p99 = scmp.eq.s32.totalorder %s25, 3
      %p100 = por %p98, %p99
      %p102 = scmp.ne.s32.totalorder %s85, %s101
      %p103 = scmp.eq.s32.totalorder %s25, 0
      %p104 = por %p102, %p103
      %p105 = scmp.le.s32.totalorder 1, %s19
      %p106 = scmp.lt.s32.totalorder %s19, 5
      %p107 = pnand %p105, %p106
      %p108 = pneg %p107
      // Predicated region
      $region9: #{tpu_custom_call.1} parent=5 // pred_check
        _
      $region10: #{tpu_custom_call.1} parent=5 // pred_check_branch
        %110 = sbr.rel (%p107) target = $region12
      $region11: #{tpu_custom_call.1} parent=5 // pred_region
        %s111 = ssub.s32 %s19, 1
      $region12: #{tpu_custom_call.1} parent=5 // pred_fallthru
        _
      %p112 = scmp.lt.s32.totalorder %s19, 4
      // Predicated region
      $region13: #{tpu_custom_call.1} parent=5 // pred_check
        %p113 = pneg %p112
      $region14: #{tpu_custom_call.1} parent=5 // pred_check_branch
        %115 = sbr.rel (%p113) target = $region16
      $region15: #{tpu_custom_call.1} parent=5 // pred_region
        // Predicated region
        $region17: #{tpu_custom_call.1} parent=15 // pred_check
          %p116 = pneg %p39
        $region18: #{tpu_custom_call.1} parent=15 // pred_check_branch
          %118 = sbr.rel (%p116) target = $region20
        $region19: #{tpu_custom_call.1} parent=15 // pred_region
          %s119 = smul.u32 8, %s19
          %p120 = scmp.lt.s32.totalorder %s119, 31
          %s121 = scalar_select %p120, %s119, 31
          %s122 = smul.addr %s121, 8
          %s123 = scalar_lea.vmem %s1, %s122
          %s124 = smul.u32 8, %s19
        $region20: #{tpu_custom_call.1} parent=15 // pred_fallthru
          _
        // Predicated region
        $region21: #{tpu_custom_call.1} parent=15 // pred_check
          %p125 = pneg %p65
        $region22: #{tpu_custom_call.1} parent=15 // pred_check_branch
          %127 = sbr.rel (%p125) target = $region24
        $region23: #{tpu_custom_call.1} parent=15 // pred_region
          %s128 = smul.u32 8, %s19
          %p129 = scmp.lt.s32.totalorder %s128, 31
          %s130 = scalar_select %p129, %s128, 31
          %s131 = smul.addr %s130, 8
          %s132 = scalar_lea.vmem %s3, %s131
          %s133 = smul.u32 8, %s19
        $region24: #{tpu_custom_call.1} parent=15 // pred_fallthru
          _
      $region16: #{tpu_custom_call.1} parent=5 // pred_fallthru
        _
      %p134 = scmp.le.s32.totalorder 1, %s19
      %p135 = scmp.lt.s32.totalorder %s19, 5
      %p136 = pnand %p134, %p135
      %p137 = pneg %p136
      // Predicated region
      $region25: #{tpu_custom_call.1} parent=5 // pred_check
        _
      $region26: #{tpu_custom_call.1} parent=5 // pred_check_branch
        %139 = sbr.rel (%p136) target = $region28
      $region27: #{tpu_custom_call.1} parent=5 // pred_region
        %s140 = ssub.s32 %s19, 1
        %s141 = smul.u32 8, %s24
        %p142 = scmp.lt.s32.totalorder %s141, 31
        %s143 = scalar_select %p142, %s141, 31
        %s144 = smul.addr %s143, 8
        %s145 = scalar_lea.vmem %s1, %s144
        %p146 = pneg %p45
        %p147 = pneg %p42
        %s148 = smul.u32 8, %s24
        %p149 = scmp.lt.s32.totalorder %s148, 31
        %s150 = scalar_select %p149, %s148, 31
        %s151 = smul.addr %s150, 8
        %s152 = scalar_lea.vmem %s3, %s151
        %p153 = pneg %p71
        %p154 = pneg %p68
        %p155 = pneg %p97
        %p156 = pneg %p94
        %s157 = sand.u32 %s84, 1
        %s158 = scalar_lea.sflag [#allocation7], %s157
        %s159 = sand.u32 %s84, 1
        %s160 = smul.addr %s159, 64
        %s161 = scalar_lea.vmem [#allocation6], %s160
        %s162 = smul.u32 8, %s24
        %p163 = scmp.lt.s32.totalorder %s162, 31
        %s164 = scalar_select %p163, %s162, 31
        %s165 = smul.addr %s164, 8
        %s166 = scalar_lea.vmem %s1, %s165
        %s167 = smul.u32 8, %s24
        %s168 = smul.u32 8, %s24
        %p169 = scmp.lt.s32.totalorder %s168, 31
        %s170 = scalar_select %p169, %s168, 31
        %s171 = smul.addr %s170, 8
        %s172 = scalar_lea.vmem %s3, %s171
        %s173 = smul.u32 8, %s24
        %s174 = smul.u32 8, %s24
        %s175 = smul.u32 %s24, 512
        loop: start=0, step=1, limit=64
        $region29: #{tpu_custom_call.1} parent=27 // loop_pre_header
          _
        $region30: #{tpu_custom_call.1} parent=27 // loop_header
          %s177 = sphi 0, %s181
          %p178 = scmp.ge.s32.totalorder %s177, 64
        $region31: #{tpu_custom_call.1} parent=27 // loop_header_branch
          %180 = sbr.rel (%p178) target = $region35
        $region32: #{tpu_custom_call.1} parent=27 // loop_body
          %s182 = smul.u32 %s177, 8
          %s183 = sadd.s32 %s175, %s182
          %s184 = sld [smem:[#allocation5 + %s183]]
          %s185 = smul.addr %s184, 16
          %s186 = scalar_lea.hbm %s2, %s185
          %s187 = scalar_lea.vmem [#allocation2], %s177
          // Predicated region
          $region36: #{tpu_custom_call.1} parent=32 // pred_check
            _
          $region37: #{tpu_custom_call.1} parent=32 // pred_check_branch
            %189 = sbr.rel target = $region39
          $region38: #{tpu_custom_call.1} parent=32 // pred_region
            %190 = sst [smem:[#allocation10]] [#allocation9]
            %191 = sst [smem:[#allocation11]] [#allocation8]
          $region39: #{tpu_custom_call.1} parent=32 // pred_fallthru
            _
          %193 = shalt.err (0)
          %s195 = sshll.u32 %s187, 4
          %s196 = int_to_ptr.vmem [resolvable:$true] %s195
          %198 = dma.hbm_to_vmem [thread:$0]  %s186, 16, %s196, [#allocation3]
          %s199 = sadd.s32 %s183, 1
          %s200 = sld [smem:[#allocation5 + %s199]]
          %s201 = sadd.s32 %s177, 64
          %s202 = smul.addr %s200, 16
          %s203 = scalar_lea.hbm %s2, %s202
          %s204 = scalar_lea.vmem [#allocation2], %s201
          // Predicated region
          $region40: #{tpu_custom_call.1} parent=32 // pred_check
            _
          $region41: #{tpu_custom_call.1} parent=32 // pred_check_branch
            %206 = sbr.rel target = $region43
          $region42: #{tpu_custom_call.1} parent=32 // pred_region
            %207 = sst [smem:[#allocation10]] [#allocation13]
            %208 = sst [smem:[#allocation11]] [#allocation12]
          $region43: #{tpu_custom_call.1} parent=32 // pred_fallthru
            _
          %210 = shalt.err (0)
          %s212 = sshll.u32 %s204, 4
          %s213 = int_to_ptr.vmem [resolvable:$true] %s212
          %215 = dma.hbm_to_vmem [thread:$0]  %s203, 16, %s213, [#allocation3]
          %s216 = sadd.s32 %s183, 2
          %s217 = sld [smem:[#allocation5 + %s216]]
          %s218 = sadd.s32 %s177, 128
          %s219 = smul.addr %s217, 16
          %s220 = scalar_lea.hbm %s2, %s219
          %s221 = scalar_lea.vmem [#allocation2], %s218
          // Predicated region
          $region44: #{tpu_custom_call.1} parent=32 // pred_check
            _
          $region45: #{tpu_custom_call.1} parent=32 // pred_check_branch
            %223 = sbr.rel target = $region47
          $region46: #{tpu_custom_call.1} parent=32 // pred_region
            %224 = sst [smem:[#allocation10]] [#allocation15]
            %225 = sst [smem:[#allocation11]] [#allocation14]
          $region47: #{tpu_custom_call.1} parent=32 // pred_fallthru
            _
          %227 = shalt.err (0)
          %s229 = sshll.u32 %s221, 4
          %s230 = int_to_ptr.vmem [resolvable:$true] %s229
          %232 = dma.hbm_to_vmem [thread:$0]  %s220, 16, %s230, [#allocation3]
          %s233 = sadd.s32 %s183, 3
          %s234 = sld [smem:[#allocation5 + %s233]]
          %s235 = sadd.s32 %s177, 192
          %s236 = smul.addr %s234, 16
          %s237 = scalar_lea.hbm %s2, %s236
          %s238 = scalar_lea.vmem [#allocation2], %s235
          // Predicated region
          $region48: #{tpu_custom_call.1} parent=32 // pred_check
            _
          $region49: #{tpu_custom_call.1} parent=32 // pred_check_branch
            %240 = sbr.rel target = $region51
          $region50: #{tpu_custom_call.1} parent=32 // pred_region
            %241 = sst [smem:[#allocation10]] [#allocation17]
            %242 = sst [smem:[#allocation11]] [#allocation16]
          $region51: #{tpu_custom_call.1} parent=32 // pred_fallthru
            _
          %244 = shalt.err (0)
          %s246 = sshll.u32 %s238, 4
          %s247 = int_to_ptr.vmem [resolvable:$true] %s246
          %249 = dma.hbm_to_vmem [thread:$0]  %s237, 16, %s247, [#allocation3]
          %s250 = sadd.s32 %s183, 4
          %s251 = sld [smem:[#allocation5 + %s250]]
          %s252 = sadd.s32 %s177, 256
          %s253 = smul.addr %s251, 16
          %s254 = scalar_lea.hbm %s2, %s253
          %s255 = scalar_lea.vmem [#allocation2], %s252
          // Predicated region
          $region52: #{tpu_custom_call.1} parent=32 // pred_check
            _
          $region53: #{tpu_custom_call.1} parent=32 // pred_check_branch
            %257 = sbr.rel target = $region55
          $region54: #{tpu_custom_call.1} parent=32 // pred_region
            %258 = sst [smem:[#allocation10]] [#allocation19]
            %259 = sst [smem:[#allocation11]] [#allocation18]
          $region55: #{tpu_custom_call.1} parent=32 // pred_fallthru
            _
          %261 = shalt.err (0)
          %s263 = sshll.u32 %s255, 4
          %s264 = int_to_ptr.vmem [resolvable:$true] %s263
          %266 = dma.hbm_to_vmem [thread:$0]  %s254, 16, %s264, [#allocation3]
          %s267 = sadd.s32 %s183, 5
          %s268 = sld [smem:[#allocation5 + %s267]]
          %s269 = sadd.s32 %s177, 320
          %s270 = smul.addr %s268, 16
          %s271 = scalar_lea.hbm %s2, %s270
          %s272 = scalar_lea.vmem [#allocation2], %s269
          // Predicated region
          $region56: #{tpu_custom_call.1} parent=32 // pred_check
            _
          $region57: #{tpu_custom_call.1} parent=32 // pred_check_branch
            %274 = sbr.rel target = $region59
          $region58: #{tpu_custom_call.1} parent=32 // pred_region
            %275 = sst [smem:[#allocation10]] [#allocation21]
            %276 = sst [smem:[#allocation11]] [#allocation20]
          $region59: #{tpu_custom_call.1} parent=32 // pred_fallthru
            _
          %278 = shalt.err (0)
          %s280 = sshll.u32 %s272, 4
          %s281 = int_to_ptr.vmem [resolvable:$true] %s280
          %283 = dma.hbm_to_vmem [thread:$0]  %s271, 16, %s281, [#allocation3]
          %s284 = sadd.s32 %s183, 6
          %s285 = sld [smem:[#allocation5 + %s284]]
          %s286 = sadd.s32 %s177, 384
          %s287 = smul.addr %s285, 16
          %s288 = scalar_lea.hbm %s2, %s287
          %s289 = scalar_lea.vmem [#allocation2], %s286
          // Predicated region
          $region60: #{tpu_custom_call.1} parent=32 // pred_check
            _
          $region61: #{tpu_custom_call.1} parent=32 // pred_check_branch
            %291 = sbr.rel target = $region63
          $region62: #{tpu_custom_call.1} parent=32 // pred_region
            %292 = sst [smem:[#allocation10]] [#allocation23]
            %293 = sst [smem:[#allocation11]] [#allocation22]
          $region63: #{tpu_custom_call.1} parent=32 // pred_fallthru
            _
          %295 = shalt.err (0)
          %s297 = sshll.u32 %s289, 4
          %s298 = int_to_ptr.vmem [resolvable:$true] %s297
          %300 = dma.hbm_to_vmem [thread:$0]  %s288, 16, %s298, [#allocation3]
          %s301 = sadd.s32 %s183, 7
          %s302 = sld [smem:[#allocation5 + %s301]]
          %s303 = sadd.s32 %s177, 448
          %s304 = smul.addr %s302, 16
          %s305 = scalar_lea.hbm %s2, %s304
          %s306 = scalar_lea.vmem [#allocation2], %s303
          // Predicated region
          $region64: #{tpu_custom_call.1} parent=32 // pred_check
            _
          $region65: #{tpu_custom_call.1} parent=32 // pred_check_branch
            %308 = sbr.rel target = $region67
          $region66: #{tpu_custom_call.1} parent=32 // pred_region
            %309 = sst [smem:[#allocation10]] [#allocation25]
            %310 = sst [smem:[#allocation11]] [#allocation24]
          $region67: #{tpu_custom_call.1} parent=32 // pred_fallthru
            _
          %312 = shalt.err (0)
          %s314 = sshll.u32 %s306, 4
          %s315 = int_to_ptr.vmem [resolvable:$true] %s314
          %317 = dma.hbm_to_vmem [thread:$0]  %s305, 16, %s315, [#allocation3]
        $region33: #{tpu_custom_call.1} parent=27 // loop_footer
          %s181 = sadd.s32 1, %s177
        $region34: #{tpu_custom_call.1} parent=27 // loop_footer_branch
          %176 = sbr.rel target = $region30
        $region35: #{tpu_custom_call.1} parent=27 // loop_exit
          _
        %v318 = vld [vmem:[%s166] sm:$0xff]
        %v319 = vld [vmem:[%s166 + $0x8] sm:$0xff]
        %v320 = vld [vmem:[%s166 + $0x10] sm:$0xff]
        %v321 = vld [vmem:[%s166 + $0x18] sm:$0xff]
        %v322 = vld [vmem:[%s166 + $0x20] sm:$0xff]
        %v323 = vld [vmem:[%s166 + $0x28] sm:$0xff]
        %v324 = vld [vmem:[%s166 + $0x30] sm:$0xff]
        %v325 = vld [vmem:[%s166 + $0x38] sm:$0xff]
        %vm326 = vcmask 64512
        %v327 = vsel %vm326, %v318, -inf
        %328 = vmax.xlane.f32.xlu0 %v327
        %v329 = vpop.xlane.xlu0 %328
        %v330 = vsel %vm326, %v319, -inf
        %331 = vmax.xlane.f32.xlu0 %v330
        %v332 = vpop.xlane.xlu0 %331
        %v333 = vsel %vm326, %v320, -inf
        %334 = vmax.xlane.f32.xlu0 %v333
        %v335 = vpop.xlane.xlu0 %334
        %v336 = vsel %vm326, %v321, -inf
        %337 = vmax.xlane.f32.xlu0 %v336
        %v338 = vpop.xlane.xlu0 %337
        %v339 = vsel %vm326, %v322, -inf
        %340 = vmax.xlane.f32.xlu0 %v339
        %v341 = vpop.xlane.xlu0 %340
        %v342 = vsel %vm326, %v323, -inf
        %343 = vmax.xlane.f32.xlu0 %v342
        %v344 = vpop.xlane.xlu0 %343
        %v345 = vsel %vm326, %v324, -inf
        %346 = vmax.xlane.f32.xlu0 %v345
        %v347 = vpop.xlane.xlu0 %346
        %v348 = vsel %vm326, %v325, -inf
        %349 = vmax.xlane.f32.xlu0 %v348
        %v350 = vpop.xlane.xlu0 %349
        %v351 = vsub.f32 %v318, %v329
        %v352 = vsub.f32 %v319, %v332
        %v353 = vsub.f32 %v320, %v335
        %v354 = vsub.f32 %v321, %v338
        %v355 = vsub.f32 %v322, %v341
        %v356 = vsub.f32 %v323, %v344
        %v357 = vsub.f32 %v324, %v347
        %v358 = vsub.f32 %v325, %v350
        %v359 = vmul.f32 %v351, 1.442695
        %v360 = vpow.pop %v359
        %v361 = vmul.f32 %v352, 1.442695
        %v362 = vpow.pop %v361
        %v363 = vmul.f32 %v353, 1.442695
        %v364 = vpow.pop %v363
        %v365 = vmul.f32 %v354, 1.442695
        %v366 = vpow.pop %v365
        %v367 = vmul.f32 %v355, 1.442695
        %v368 = vpow.pop %v367
        %v369 = vmul.f32 %v356, 1.442695
        %v370 = vpow.pop %v369
        %v371 = vmul.f32 %v357, 1.442695
        %v372 = vpow.pop %v371
        %v373 = vmul.f32 %v358, 1.442695
        %v374 = vpow.pop %v373
        %v375 = vsel %vm326, %v360, 0.0
        %376 = vadd.xlane.f32.xlu0 %v375
        %v377 = vpop.xlane.xlu0 %376
        %v378 = vsel %vm326, %v362, 0.0
        %379 = vadd.xlane.f32.xlu0 %v378
        %v380 = vpop.xlane.xlu0 %379
        %v381 = vsel %vm326, %v364, 0.0
        %382 = vadd.xlane.f32.xlu0 %v381
        %v383 = vpop.xlane.xlu0 %382
        %v384 = vsel %vm326, %v366, 0.0
        %385 = vadd.xlane.f32.xlu0 %v384
        %v386 = vpop.xlane.xlu0 %385
        %v387 = vsel %vm326, %v368, 0.0
        %388 = vadd.xlane.f32.xlu0 %v387
        %v389 = vpop.xlane.xlu0 %388
        %v390 = vsel %vm326, %v370, 0.0
        %391 = vadd.xlane.f32.xlu0 %v390
        %v392 = vpop.xlane.xlu0 %391
        %v393 = vsel %vm326, %v372, 0.0
        %394 = vadd.xlane.f32.xlu0 %v393
        %v395 = vpop.xlane.xlu0 %394
        %v396 = vsel %vm326, %v374, 0.0
        %397 = vadd.xlane.f32.xlu0 %v396
        %v398 = vpop.xlane.xlu0 %397
        %s399 = smul.u32 512, 1
        %s400 = sshll.u32 %s399, 4
        %401 = dma.done [#allocation3], %s400
        %v402 = vld [vmem:[#allocation2] sm:$0xff]
        %v403 = vld [vmem:[#allocation2 + $0x8] sm:$0xff]
        %v404 = vld [vmem:[#allocation2 + $0x10] sm:$0xff]
        %v405 = vld [vmem:[#allocation2 + $0x18] sm:$0xff]
        %v406 = vld [vmem:[#allocation2 + $0x20] sm:$0xff]
        %v407 = vld [vmem:[#allocation2 + $0x28] sm:$0xff]
        %v408 = vld [vmem:[#allocation2 + $0x30] sm:$0xff]
        %v409 = vld [vmem:[#allocation2 + $0x38] sm:$0xff]
        %411 = vset.pattern.permute.xlu0 0
        %412 = vperm.xlu0 %411, %v360
        %v413 = vpop.permute.xlu0 %412
        %416 = vset.pattern.permute.xlu0 0
        %417 = vperm.xlu0 %416, %v362
        %v418 = vpop.permute.xlu0 %417
        %421 = vset.pattern.permute.xlu0 0
        %422 = vperm.xlu0 %421, %v364
        %v423 = vpop.permute.xlu0 %422
        %426 = vset.pattern.permute.xlu0 0
        %427 = vperm.xlu0 %426, %v366
        %v428 = vpop.permute.xlu0 %427
        %431 = vset.pattern.permute.xlu0 0
        %432 = vperm.xlu0 %431, %v368
        %v433 = vpop.permute.xlu0 %432
        %436 = vset.pattern.permute.xlu0 0
        %437 = vperm.xlu0 %436, %v370
        %v438 = vpop.permute.xlu0 %437
        %441 = vset.pattern.permute.xlu0 0
        %442 = vperm.xlu0 %441, %v372
        %v443 = vpop.permute.xlu0 %442
        %446 = vset.pattern.permute.xlu0 0
        %447 = vperm.xlu0 %446, %v374
        %v448 = vpop.permute.xlu0 %447
        %v450 = vmul.f32 %v413, %v402
        %v451 = vmul.f32 %v418, %v403
        %v452 = vmul.f32 %v423, %v404
        %v453 = vmul.f32 %v428, %v405
        %v454 = vmul.f32 %v433, %v406
        %v455 = vmul.f32 %v438, %v407
        %v456 = vmul.f32 %v443, %v408
        %v457 = vmul.f32 %v448, %v409
        %v458 = vadd.f32 %v450, 0.0
        %v459 = vadd.f32 %v451, 0.0
        %v460 = vadd.f32 %v452, 0.0
        %v461 = vadd.f32 %v453, 0.0
        %v462 = vadd.f32 %v454, 0.0
        %v463 = vadd.f32 %v455, 0.0
        %v464 = vadd.f32 %v456, 0.0
        %v465 = vadd.f32 %v457, 0.0
        %v466 = vld [vmem:[#allocation2 + $0x40] sm:$0xff]
        %v467 = vld [vmem:[#allocation2 + $0x48] sm:$0xff]
        %v468 = vld [vmem:[#allocation2 + $0x50] sm:$0xff]
        %v469 = vld [vmem:[#allocation2 + $0x58] sm:$0xff]
        %v470 = vld [vmem:[#allocation2 + $0x60] sm:$0xff]
        %v471 = vld [vmem:[#allocation2 + $0x68] sm:$0xff]
        %v472 = vld [vmem:[#allocation2 + $0x70] sm:$0xff]
        %v473 = vld [vmem:[#allocation2 + $0x78] sm:$0xff]
        %474 = vset.pattern.permute.xlu0 1
        %475 = vperm.xlu0 %474, %v360
        %v476 = vpop.permute.xlu0 %475
        %478 = vset.pattern.permute.xlu0 1
        %479 = vperm.xlu0 %478, %v362
        %v480 = vpop.permute.xlu0 %479
        %482 = vset.pattern.permute.xlu0 1
        %483 = vperm.xlu0 %482, %v364
        %v484 = vpop.permute.xlu0 %483
        %486 = vset.pattern.permute.xlu0 1
        %487 = vperm.xlu0 %486, %v366
        %v488 = vpop.permute.xlu0 %487
        %490 = vset.pattern.permute.xlu0 1
        %491 = vperm.xlu0 %490, %v368
        %v492 = vpop.permute.xlu0 %491
        %494 = vset.pattern.permute.xlu0 1
        %495 = vperm.xlu0 %494, %v370
        %v496 = vpop.permute.xlu0 %495
        %498 = vset.pattern.permute.xlu0 1
        %499 = vperm.xlu0 %498, %v372
        %v500 = vpop.permute.xlu0 %499
        %502 = vset.pattern.permute.xlu0 1
        %503 = vperm.xlu0 %502, %v374
        %v504 = vpop.permute.xlu0 %503
        %v506 = vmul.f32 %v476, %v466
        %v507 = vmul.f32 %v480, %v467
        %v508 = vmul.f32 %v484, %v468
        %v509 = vmul.f32 %v488, %v469
        %v510 = vmul.f32 %v492, %v470
        %v511 = vmul.f32 %v496, %v471
        %v512 = vmul.f32 %v500, %v472
        %v513 = vmul.f32 %v504, %v473
        %v514 = vadd.f32 %v458, %v506
        %v515 = vadd.f32 %v459, %v507
        %v516 = vadd.f32 %v460, %v508
        %v517 = vadd.f32 %v461, %v509
        %v518 = vadd.f32 %v462, %v510
        %v519 = vadd.f32 %v463, %v511
        %v520 = vadd.f32 %v464, %v512
        %v521 = vadd.f32 %v465, %v513
        %v522 = vld [vmem:[#allocation2 + $0x80] sm:$0xff]
        %v523 = vld [vmem:[#allocation2 + $0x88] sm:$0xff]
        %v524 = vld [vmem:[#allocation2 + $0x90] sm:$0xff]
        %v525 = vld [vmem:[#allocation2 + $0x98] sm:$0xff]
        %v526 = vld [vmem:[#allocation2 + $0xa0] sm:$0xff]
        %v527 = vld [vmem:[#allocation2 + $0xa8] sm:$0xff]
        %v528 = vld [vmem:[#allocation2 + $0xb0] sm:$0xff]
        %v529 = vld [vmem:[#allocation2 + $0xb8] sm:$0xff]
        %530 = vset.pattern.permute.xlu0 2
        %531 = vperm.xlu0 %530, %v360
        %v532 = vpop.permute.xlu0 %531
        %534 = vset.pattern.permute.xlu0 2
        %535 = vperm.xlu0 %534, %v362
        %v536 = vpop.permute.xlu0 %535
        %538 = vset.pattern.permute.xlu0 2
        %539 = vperm.xlu0 %538, %v364
        %v540 = vpop.permute.xlu0 %539
        %542 = vset.pattern.permute.xlu0 2
        %543 = vperm.xlu0 %542, %v366
        %v544 = vpop.permute.xlu0 %543
        %546 = vset.pattern.permute.xlu0 2
        %547 = vperm.xlu0 %546, %v368
        %v548 = vpop.permute.xlu0 %547
        %550 = vset.pattern.permute.xlu0 2
        %551 = vperm.xlu0 %550, %v370
        %v552 = vpop.permute.xlu0 %551
        %554 = vset.pattern.permute.xlu0 2
        %555 = vperm.xlu0 %554, %v372
        %v556 = vpop.permute.xlu0 %555
        %558 = vset.pattern.permute.xlu0 2
        %559 = vperm.xlu0 %558, %v374
        %v560 = vpop.permute.xlu0 %559
        %v562 = vmul.f32 %v532, %v522
        %v563 = vmul.f32 %v536, %v523
        %v564 = vmul.f32 %v540, %v524
        %v565 = vmul.f32 %v544, %v525
        %v566 = vmul.f32 %v548, %v526
        %v567 = vmul.f32 %v552, %v527
        %v568 = vmul.f32 %v556, %v528
        %v569 = vmul.f32 %v560, %v529
        %v570 = vadd.f32 %v514, %v562
        %v571 = vadd.f32 %v515, %v563
        %v572 = vadd.f32 %v516, %v564
        %v573 = vadd.f32 %v517, %v565
        %v574 = vadd.f32 %v518, %v566
        %v575 = vadd.f32 %v519, %v567
        %v576 = vadd.f32 %v520, %v568
        %v577 = vadd.f32 %v521, %v569
        %v578 = vld [vmem:[#allocation2 + $0xc0] sm:$0xff]
        %v579 = vld [vmem:[#allocation2 + $0xc8] sm:$0xff]
        %v580 = vld [vmem:[#allocation2 + $0xd0] sm:$0xff]
        %v581 = vld [vmem:[#allocation2 + $0xd8] sm:$0xff]
        %v582 = vld [vmem:[#allocation2 + $0xe0] sm:$0xff]
        %v583 = vld [vmem:[#allocation2 + $0xe8] sm:$0xff]
        %v584 = vld [vmem:[#allocation2 + $0xf0] sm:$0xff]
        %v585 = vld [vmem:[#allocation2 + $0xf8] sm:$0xff]
        %586 = vset.pattern.permute.xlu0 3
        %587 = vperm.xlu0 %586, %v360
        %v588 = vpop.permute.xlu0 %587
        %590 = vset.pattern.permute.xlu0 3
        %591 = vperm.xlu0 %590, %v362
        %v592 = vpop.permute.xlu0 %591
        %594 = vset.pattern.permute.xlu0 3
        %595 = vperm.xlu0 %594, %v364
        %v596 = vpop.permute.xlu0 %595
        %598 = vset.pattern.permute.xlu0 3
        %599 = vperm.xlu0 %598, %v366
        %v600 = vpop.permute.xlu0 %599
        %602 = vset.pattern.permute.xlu0 3
        %603 = vperm.xlu0 %602, %v368
        %v604 = vpop.permute.xlu0 %603
        %606 = vset.pattern.permute.xlu0 3
        %607 = vperm.xlu0 %606, %v370
        %v608 = vpop.permute.xlu0 %607
        %610 = vset.pattern.permute.xlu0 3
        %611 = vperm.xlu0 %610, %v372
        %v612 = vpop.permute.xlu0 %611
        %614 = vset.pattern.permute.xlu0 3
        %615 = vperm.xlu0 %614, %v374
        %v616 = vpop.permute.xlu0 %615
        %v618 = vmul.f32 %v588, %v578
        %v619 = vmul.f32 %v592, %v579
        %v620 = vmul.f32 %v596, %v580
        %v621 = vmul.f32 %v600, %v581
        %v622 = vmul.f32 %v604, %v582
        %v623 = vmul.f32 %v608, %v583
        %v624 = vmul.f32 %v612, %v584
        %v625 = vmul.f32 %v616, %v585
        %v626 = vadd.f32 %v570, %v618
        %v627 = vadd.f32 %v571, %v619
        %v628 = vadd.f32 %v572, %v620
        %v629 = vadd.f32 %v573, %v621
        %v630 = vadd.f32 %v574, %v622
        %v631 = vadd.f32 %v575, %v623
        %v632 = vadd.f32 %v576, %v624
        %v633 = vadd.f32 %v577, %v625
        %v634 = vld [vmem:[#allocation2 + $0x100] sm:$0xff]
        %v635 = vld [vmem:[#allocation2 + $0x108] sm:$0xff]
        %v636 = vld [vmem:[#allocation2 + $0x110] sm:$0xff]
        %v637 = vld [vmem:[#allocation2 + $0x118] sm:$0xff]
        %v638 = vld [vmem:[#allocation2 + $0x120] sm:$0xff]
        %v639 = vld [vmem:[#allocation2 + $0x128] sm:$0xff]
        %v640 = vld [vmem:[#allocation2 + $0x130] sm:$0xff]
        %v641 = vld [vmem:[#allocation2 + $0x138] sm:$0xff]
        %642 = vset.pattern.permute.xlu0 4
        %643 = vperm.xlu0 %642, %v360
        %v644 = vpop.permute.xlu0 %643
        %646 = vset.pattern.permute.xlu0 4
        %647 = vperm.xlu0 %646, %v362
        %v648 = vpop.permute.xlu0 %647
        %650 = vset.pattern.permute.xlu0 4
        %651 = vperm.xlu0 %650, %v364
        %v652 = vpop.permute.xlu0 %651
        %654 = vset.pattern.permute.xlu0 4
        %655 = vperm.xlu0 %654, %v366
        %v656 = vpop.permute.xlu0 %655
        %658 = vset.pattern.permute.xlu0 4
        %659 = vperm.xlu0 %658, %v368
        %v660 = vpop.permute.xlu0 %659
        %662 = vset.pattern.permute.xlu0 4
        %663 = vperm.xlu0 %662, %v370
        %v664 = vpop.permute.xlu0 %663
        %666 = vset.pattern.permute.xlu0 4
        %667 = vperm.xlu0 %666, %v372
        %v668 = vpop.permute.xlu0 %667
        %670 = vset.pattern.permute.xlu0 4
        %671 = vperm.xlu0 %670, %v374
        %v672 = vpop.permute.xlu0 %671
        %v674 = vmul.f32 %v644, %v634
        %v675 = vmul.f32 %v648, %v635
        %v676 = vmul.f32 %v652, %v636
        %v677 = vmul.f32 %v656, %v637
        %v678 = vmul.f32 %v660, %v638
        %v679 = vmul.f32 %v664, %v639
        %v680 = vmul.f32 %v668, %v640
        %v681 = vmul.f32 %v672, %v641
        %v682 = vadd.f32 %v626, %v674
        %v683 = vadd.f32 %v627, %v675
        %v684 = vadd.f32 %v628, %v676
        %v685 = vadd.f32 %v629, %v677
        %v686 = vadd.f32 %v630, %v678
        %v687 = vadd.f32 %v631, %v679
        %v688 = vadd.f32 %v632, %v680
        %v689 = vadd.f32 %v633, %v681
        %v690 = vld [vmem:[#allocation2 + $0x140] sm:$0xff]
        %v691 = vld [vmem:[#allocation2 + $0x148] sm:$0xff]
        %v692 = vld [vmem:[#allocation2 + $0x150] sm:$0xff]
        %v693 = vld [vmem:[#allocation2 + $0x158] sm:$0xff]
        %v694 = vld [vmem:[#allocation2 + $0x160] sm:$0xff]
        %v695 = vld [vmem:[#allocation2 + $0x168] sm:$0xff]
        %v696 = vld [vmem:[#allocation2 + $0x170] sm:$0xff]
        %v697 = vld [vmem:[#allocation2 + $0x178] sm:$0xff]
        %698 = vset.pattern.permute.xlu0 5
        %699 = vperm.xlu0 %698, %v360
        %v700 = vpop.permute.xlu0 %699
        %702 = vset.pattern.permute.xlu0 5
        %703 = vperm.xlu0 %702, %v362
        %v704 = vpop.permute.xlu0 %703
        %706 = vset.pattern.permute.xlu0 5
        %707 = vperm.xlu0 %706, %v364
        %v708 = vpop.permute.xlu0 %707
        %710 = vset.pattern.permute.xlu0 5
        %711 = vperm.xlu0 %710, %v366
        %v712 = vpop.permute.xlu0 %711
        %714 = vset.pattern.permute.xlu0 5
        %715 = vperm.xlu0 %714, %v368
        %v716 = vpop.permute.xlu0 %715
        %718 = vset.pattern.permute.xlu0 5
        %719 = vperm.xlu0 %718, %v370
        %v720 = vpop.permute.xlu0 %719
        %722 = vset.pattern.permute.xlu0 5
        %723 = vperm.xlu0 %722, %v372
        %v724 = vpop.permute.xlu0 %723
        %726 = vset.pattern.permute.xlu0 5
        %727 = vperm.xlu0 %726, %v374
        %v728 = vpop.permute.xlu0 %727
        %v730 = vmul.f32 %v700, %v690
        %v731 = vmul.f32 %v704, %v691
        %v732 = vmul.f32 %v708, %v692
        %v733 = vmul.f32 %v712, %v693
        %v734 = vmul.f32 %v716, %v694
        %v735 = vmul.f32 %v720, %v695
        %v736 = vmul.f32 %v724, %v696
        %v737 = vmul.f32 %v728, %v697
        %v738 = vadd.f32 %v682, %v730
        %v739 = vadd.f32 %v683, %v731
        %v740 = vadd.f32 %v684, %v732
        %v741 = vadd.f32 %v685, %v733
        %v742 = vadd.f32 %v686, %v734
        %v743 = vadd.f32 %v687, %v735
        %v744 = vadd.f32 %v688, %v736
        %v745 = vadd.f32 %v689, %v737
        %v746 = vld [vmem:[#allocation2 + $0x180] sm:$0xff]
        %v747 = vld [vmem:[#allocation2 + $0x188] sm:$0xff]
        %v748 = vld [vmem:[#allocation2 + $0x190] sm:$0xff]
        %v749 = vld [vmem:[#allocation2 + $0x198] sm:$0xff]
        %v750 = vld [vmem:[#allocation2 + $0x1a0] sm:$0xff]
        %v751 = vld [vmem:[#allocation2 + $0x1a8] sm:$0xff]
        %v752 = vld [vmem:[#allocation2 + $0x1b0] sm:$0xff]
        %v753 = vld [vmem:[#allocation2 + $0x1b8] sm:$0xff]
        %754 = vset.pattern.permute.xlu0 6
        %755 = vperm.xlu0 %754, %v360
        %v756 = vpop.permute.xlu0 %755
        %758 = vset.pattern.permute.xlu0 6
        %759 = vperm.xlu0 %758, %v362
        %v760 = vpop.permute.xlu0 %759
        %762 = vset.pattern.permute.xlu0 6
        %763 = vperm.xlu0 %762, %v364
        %v764 = vpop.permute.xlu0 %763
        %766 = vset.pattern.permute.xlu0 6
        %767 = vperm.xlu0 %766, %v366
        %v768 = vpop.permute.xlu0 %767
        %770 = vset.pattern.permute.xlu0 6
        %771 = vperm.xlu0 %770, %v368
        %v772 = vpop.permute.xlu0 %771
        %774 = vset.pattern.permute.xlu0 6
        %775 = vperm.xlu0 %774, %v370
        %v776 = vpop.permute.xlu0 %775
        %778 = vset.pattern.permute.xlu0 6
        %779 = vperm.xlu0 %778, %v372
        %v780 = vpop.permute.xlu0 %779
        %782 = vset.pattern.permute.xlu0 6
        %783 = vperm.xlu0 %782, %v374
        %v784 = vpop.permute.xlu0 %783
        %v786 = vmul.f32 %v756, %v746
        %v787 = vmul.f32 %v760, %v747
        %v788 = vmul.f32 %v764, %v748
        %v789 = vmul.f32 %v768, %v749
        %v790 = vmul.f32 %v772, %v750
        %v791 = vmul.f32 %v776, %v751
        %v792 = vmul.f32 %v780, %v752
        %v793 = vmul.f32 %v784, %v753
        %v794 = vadd.f32 %v738, %v786
        %v795 = vadd.f32 %v739, %v787
        %v796 = vadd.f32 %v740, %v788
        %v797 = vadd.f32 %v741, %v789
        %v798 = vadd.f32 %v742, %v790
        %v799 = vadd.f32 %v743, %v791
        %v800 = vadd.f32 %v744, %v792
        %v801 = vadd.f32 %v745, %v793
        %v802 = vld [vmem:[#allocation2 + $0x1c0] sm:$0xff]
        %v803 = vld [vmem:[#allocation2 + $0x1c8] sm:$0xff]
        %v804 = vld [vmem:[#allocation2 + $0x1d0] sm:$0xff]
        %v805 = vld [vmem:[#allocation2 + $0x1d8] sm:$0xff]
        %v806 = vld [vmem:[#allocation2 + $0x1e0] sm:$0xff]
        %v807 = vld [vmem:[#allocation2 + $0x1e8] sm:$0xff]
        %v808 = vld [vmem:[#allocation2 + $0x1f0] sm:$0xff]
        %v809 = vld [vmem:[#allocation2 + $0x1f8] sm:$0xff]
        %810 = vset.pattern.permute.xlu0 7
        %811 = vperm.xlu0 %810, %v360
        %v812 = vpop.permute.xlu0 %811
        %814 = vset.pattern.permute.xlu0 7
        %815 = vperm.xlu0 %814, %v362
        %v816 = vpop.permute.xlu0 %815
        %818 = vset.pattern.permute.xlu0 7
        %819 = vperm.xlu0 %818, %v364
        %v820 = vpop.permute.xlu0 %819
        %822 = vset.pattern.permute.xlu0 7
        %823 = vperm.xlu0 %822, %v366
        %v824 = vpop.permute.xlu0 %823
        %826 = vset.pattern.permute.xlu0 7
        %827 = vperm.xlu0 %826, %v368
        %v828 = vpop.permute.xlu0 %827
        %830 = vset.pattern.permute.xlu0 7
        %831 = vperm.xlu0 %830, %v370
        %v832 = vpop.permute.xlu0 %831
        %834 = vset.pattern.permute.xlu0 7
        %835 = vperm.xlu0 %834, %v372
        %v836 = vpop.permute.xlu0 %835
        %838 = vset.pattern.permute.xlu0 7
        %839 = vperm.xlu0 %838, %v374
        %v840 = vpop.permute.xlu0 %839
        %v842 = vmul.f32 %v812, %v802
        %v843 = vmul.f32 %v816, %v803
        %v844 = vmul.f32 %v820, %v804
        %v845 = vmul.f32 %v824, %v805
        %v846 = vmul.f32 %v828, %v806
        %v847 = vmul.f32 %v832, %v807
        %v848 = vmul.f32 %v836, %v808
        %v849 = vmul.f32 %v840, %v809
        %v850 = vadd.f32 %v794, %v842
        %v851 = vadd.f32 %v795, %v843
        %v852 = vadd.f32 %v796, %v844
        %v853 = vadd.f32 %v797, %v845
        %v854 = vadd.f32 %v798, %v846
        %v855 = vadd.f32 %v799, %v847
        %v856 = vadd.f32 %v800, %v848
        %v857 = vadd.f32 %v801, %v849
        %v858 = vrcp.pop %v377
        %v859 = vrcp.pop %v380
        %v860 = vrcp.pop %v383
        %v861 = vrcp.pop %v386
        %v862 = vrcp.pop %v389
        %v863 = vrcp.pop %v392
        %v864 = vrcp.pop %v395
        %v865 = vrcp.pop %v398
        %v866 = vmul.f32 %v377, %v858
        %v867 = vmul.f32 %v380, %v859
        %v868 = vmul.f32 %v383, %v860
        %v869 = vmul.f32 %v386, %v861
        %v870 = vmul.f32 %v389, %v862
        %v871 = vmul.f32 %v392, %v863
        %v872 = vmul.f32 %v395, %v864
        %v873 = vmul.f32 %v398, %v865
        %v874 = vsub.f32 2.0, %v866
        %v875 = vsub.f32 2.0, %v867
        %v876 = vsub.f32 2.0, %v868
        %v877 = vsub.f32 2.0, %v869
        %v878 = vsub.f32 2.0, %v870
        %v879 = vsub.f32 2.0, %v871
        %v880 = vsub.f32 2.0, %v872
        %v881 = vsub.f32 2.0, %v873
        %v882 = vmul.f32 %v858, %v874
        %v883 = vmul.f32 %v859, %v875
        %v884 = vmul.f32 %v860, %v876
        %v885 = vmul.f32 %v861, %v877
        %v886 = vmul.f32 %v862, %v878
        %v887 = vmul.f32 %v863, %v879
        %v888 = vmul.f32 %v864, %v880
        %v889 = vmul.f32 %v865, %v881
        %v890 = vmul.f32 %v850, %v882
        %v891 = vmul.f32 %v851, %v883
        %v892 = vmul.f32 %v852, %v884
        %v893 = vmul.f32 %v853, %v885
        %v894 = vmul.f32 %v854, %v886
        %v895 = vmul.f32 %v855, %v887
        %v896 = vmul.f32 %v856, %v888
        %v897 = vmul.f32 %v857, %v889
        %v898 = vld [vmem:[%s172] sm:$0xff]
        %v899 = vld [vmem:[%s172 + $0x8] sm:$0xff]
        %v900 = vld [vmem:[%s172 + $0x10] sm:$0xff]
        %v901 = vld [vmem:[%s172 + $0x18] sm:$0xff]
        %v902 = vld [vmem:[%s172 + $0x20] sm:$0xff]
        %v903 = vld [vmem:[%s172 + $0x28] sm:$0xff]
        %v904 = vld [vmem:[%s172 + $0x30] sm:$0xff]
        %v905 = vld [vmem:[%s172 + $0x38] sm:$0xff]
        %v906 = vadd.f32 %v890, %v898
        %v907 = vadd.f32 %v891, %v899
        %v908 = vadd.f32 %v892, %v900
        %v909 = vadd.f32 %v893, %v901
        %v910 = vadd.f32 %v894, %v902
        %v911 = vadd.f32 %v895, %v903
        %v912 = vadd.f32 %v896, %v904
        %v913 = vadd.f32 %v897, %v905
        %914 = vst [vmem:[%s161] sm:$0xff] %v906
        %915 = vst [vmem:[%s161 + $0x8] sm:$0xff] %v907
        %916 = vst [vmem:[%s161 + $0x10] sm:$0xff] %v908
        %917 = vst [vmem:[%s161 + $0x18] sm:$0xff] %v909
        %918 = vst [vmem:[%s161 + $0x20] sm:$0xff] %v910
        %919 = vst [vmem:[%s161 + $0x28] sm:$0xff] %v911
        %920 = vst [vmem:[%s161 + $0x30] sm:$0xff] %v912
        %921 = vst [vmem:[%s161 + $0x38] sm:$0xff] %v913
        %s922 = sand.u32 %s84, 1
        %s923 = scalar_lea.sflag [#allocation7], %s922
        %s924 = sand.u32 %s84, 1
        %s925 = smul.addr %s924, 64
        %s926 = scalar_lea.vmem [#allocation6], %s925
        // Predicated region
        $region68: #{tpu_custom_call.1} parent=27 // pred_check
          %p927 = pneg %p94
        $region69: #{tpu_custom_call.1} parent=27 // pred_check_branch
          %929 = sbr.rel (%p927) target = $region71
        $region70: #{tpu_custom_call.1} parent=27 // pred_region
          %s930 = smul.u32 8, %s24
          %s932 = ssub.s32 1024, 1024
          %933 = vsyncadd %s923, %s932
          %s934 = smul.addr %s930, 128
          %s935 = scalar_lea.hbm %s4, %s934
          %s936 = sshll.u32 %s926, 4
          %s937 = int_to_ptr.vmem [resolvable:$true] %s936
          %942 = dma.vmem_to_hbm [thread:$0]  %s937, 1024, %s935, %s923, 128, 128, 8
        $region71: #{tpu_custom_call.1} parent=27 // pred_fallthru
          _
      $region28: #{tpu_custom_call.1} parent=5 // pred_fallthru
        _
      %p943 = scmp.le.s32.totalorder 2, %s19
      // Predicated region
      $region72: #{tpu_custom_call.1} parent=5 // pred_check
        %p944 = pneg %p943
      $region73: #{tpu_custom_call.1} parent=5 // pred_check_branch
        %946 = sbr.rel (%p944) target = $region75
      $region74: #{tpu_custom_call.1} parent=5 // pred_region
        %s947 = ssub.s32 %s19, 2
        // Predicated region
        $region76: #{tpu_custom_call.1} parent=74 // pred_check
          %p948 = pneg %p100
        $region77: #{tpu_custom_call.1} parent=74 // pred_check_branch
          %950 = sbr.rel (%p948) target = $region79
        $region78: #{tpu_custom_call.1} parent=74 // pred_region
          %s951 = sand.u32 %s85, 1
          %s952 = scalar_lea.sflag [#allocation7], %s951
          %s953 = sand.u32 %s85, 1
          %s954 = smul.addr %s953, 64
          %s955 = scalar_lea.vmem [#allocation6], %s954
          %956 = dma.done %s952, 1024
        $region79: #{tpu_custom_call.1} parent=74 // pred_fallthru
          _
      $region75: #{tpu_custom_call.1} parent=5 // pred_fallthru
        _
    $region6: #{tpu_custom_call.1} parent=1 // loop_footer
      %s23 = sadd.s32 1, %s19
    $region7: #{tpu_custom_call.1} parent=1 // loop_footer_branch
      %18 = sbr.rel target = $region3
    $region8: #{tpu_custom_call.1} parent=1 // loop_exit
      _
    %957 = vsyncpa [#allocation7], 1
    %s958 = scalar_lea.sflag [#allocation7], 1
    %959 = vsyncpa %s958, 1
  %960 = vsyncmov [#allocation3]
  %s961 = vpop.sfrf %960
  %p962 = scmp.eq.s32.totalorder %s961, 0
  %p963 = pneg %p962
  %965 = shalt.err (%p963)

</llo_original>
